<compile_context>
chip_gen: v6e
topology: v6e:2x2x1
jax: 0.10.0
libtpu: 0.0.40
codegen_flags: <defaults>
</compile_context>

<pallas_src>
import functools

import jax
import jax.numpy as jnp
from jax.experimental import pallas as pl
from jax.experimental.pallas import tpu as pltpu


# ---- packed-parameter slab layout (rows x 128 lanes, f32) -------------------
ROW_W1 = 0     # rows  0..7  cols 0..31 : W1 (6,32) zero-padded to 8 input rows
ROW_W2 = 8     # rows  8..39 cols 0..15 : W2 (32,16)
ROW_W3T = 40   # rows 40..43 cols 0..15 : W3^T (4,16)
ROW_B1 = 48    # row  48     cols 0..31 : b1
ROW_B2 = 49    # row  49     cols 0..15 : b2
ROW_B3 = 50    # row  50     cols 0..3  : b3
ROW_W4T = 51   # row  51     cols 0..3  : W4^T (1,4)
ROW_B4 = 52    # row  52     col  0     : b4
SLAB_ROWS = 64
SLAB_COLS = 128

CHUNK = 8      # problems processed per grid step


def agent_kernel(xt_ref, p_ref, o_ref, *, bp, n):
    # xt_ref: (bp*n, 8) fused input rows for this chunk of `bp` problems.
    # p_ref : (64, 128) resident parameter slab.
    # o_ref : (bp*n, 1) softmax outputs.
    xt = xt_ref[...]                                    # (bp*n, 8) f32

    # Static slices of the resident parameter slab (no extra DMAs).
    w1 = p_ref[ROW_W1:ROW_W1 + 8, 0:32]                 # (8, 32), rows 6-7 = 0
    w2 = p_ref[ROW_W2:ROW_W2 + 32, 0:16]                # (32, 16)
    w3t = p_ref[ROW_W3T:ROW_W3T + 4, 0:16]              # (4, 16)  (layer-3 W^T)
    b1 = p_ref[ROW_B1:ROW_B1 + 1, 0:32]                 # (1, 32)
    b2 = p_ref[ROW_B2:ROW_B2 + 1, 0:16]                 # (1, 16)
    b3 = p_ref[ROW_B3:ROW_B3 + 1, 0:4]                  # (1, 4)
    w4 = p_ref[ROW_W4T:ROW_W4T + 1, 0:4]                # (1, 4)
    b4 = p_ref[ROW_B4:ROW_B4 + 1, 0:1]                  # (1, 1)

    # Layers 1 & 2 for the WHOLE chunk on the MXU.  Lanes 6 (tags) and 7 (pad)
    # of xt hit the zero-padded rows of w1, so they contribute nothing.
    h = jnp.maximum(
        jnp.dot(xt, w1, preferred_element_type=jnp.float32) + b1, 0.0)
    h = jnp.maximum(
        jnp.dot(h, w2, preferred_element_type=jnp.float32) + b2, 0.0)

    # Layers 3 (16->4, ReLU) and 4 (4->1) on the VPU/XLU: per hidden unit j,
    #   z_j = sum_k h[:,k] * W3[k,j] + b3[j];  y += relu(z_j) * W4[j]
    y = jnp.zeros((bp * n, 1), jnp.float32) + b4
    for j in range(4):
        zj = jnp.sum(h * w3t[j:j + 1, :], axis=-1, keepdims=True) \
             + b3[:, j:j + 1]
        y = y + jnp.maximum(zj, 0.0) * w4[:, j:j + 1]

    # torch.sub(x, tags): tags were packed into lane 6 of the fused input.
    y = y - xt[:, 6:7]

    # Softmax over dim 0 (the n candidate rows of each problem), per problem.
    for i in range(bp):
        yi = y[i * n:(i + 1) * n, :]                    # (n, 1) static slice
        m = jnp.max(yi, axis=0, keepdims=True)
        e = jnp.exp(yi - m)
        s = jnp.sum(e, axis=0, keepdims=True)
        o_ref[i * n:(i + 1) * n, :] = e * pl.reciprocal(s, approx=False)


def pack_params(params):
    """Pack all weights/biases into one (64,128) f32 VMEM slab."""
    slab = jnp.zeros((SLAB_ROWS, SLAB_COLS), jnp.float32)
    slab = slab.at[ROW_W1:ROW_W1 + 6, 0:32].set(params["w1"])          # (6,32)
    slab = slab.at[ROW_W2:ROW_W2 + 32, 0:16].set(params["w2"])         # (32,16)
    slab = slab.at[ROW_W3T:ROW_W3T + 4, 0:16].set(params["w3"].T)      # (4,16)
    slab = slab.at[ROW_B1:ROW_B1 + 1, 0:32].set(params["b1"])
    slab = slab.at[ROW_B2:ROW_B2 + 1, 0:16].set(params["b2"])
    slab = slab.at[ROW_B3:ROW_B3 + 1, 0:4].set(params["b3"])
    slab = slab.at[ROW_W4T:ROW_W4T + 1, 0:4].set(params["w4"].T)       # (1,4)
    slab = slab.at[ROW_B4:ROW_B4 + 1, 0:1].set(params["b4"])
    return slab


def agent_forward(x, tags, params):
    """Forward pass.

    x: (N, 6) or (B, N, 6) f32;  tags: (N, 1) or (B, N, 1) f32.
    Returns softmax over the N axis, per problem: (N, 1) or (B, N, 1).
    """
    slab = pack_params(params)

    single = (x.ndim == 2)
    if single:
        x = x[None]
        tags = tags[None]
    b, n, _ = x.shape

    # Fuse x and tags into one (B, N, 8) input: lanes 0-5 = x, lane 6 = tags.
    xt = jnp.concatenate(
        [x.astype(jnp.float32), tags.astype(jnp.float32),
         jnp.zeros((b, n, 1), jnp.float32)], axis=-1)          # (b, n, 8)

    # Chunk the batch: up to CHUNK problems per grid step.
    bp = b if b <= CHUNK else CHUNK
    b_pad = ((b + bp - 1) // bp) * bp
    if b_pad != b:
        # Zero-padded problems produce a uniform softmax (no NaNs); discarded.
        xt = jnp.concatenate(
            [xt, jnp.zeros((b_pad - b, n, 8), jnp.float32)], axis=0)

    rows = bp * n
    xt_flat = xt.reshape(b_pad * n, 8)          # wrapper-side layout plumbing
    num_chunks = b_pad // bp

    out_flat = pl.pallas_call(
        functools.partial(agent_kernel, bp=bp, n=n),
        out_shape=jax.ShapeDtypeStruct((b_pad * n, 1), jnp.float32),
        grid=(num_chunks,),
        in_specs=[
            pl.BlockSpec((rows, 8), lambda i: (i, 0)),
            # Constant block index -> slab stays VMEM-resident across steps.
            pl.BlockSpec((SLAB_ROWS, SLAB_COLS), lambda i: (0, 0)),
        ],
        out_specs=pl.BlockSpec((rows, 1), lambda i: (i, 0)),
        compiler_params=pltpu.CompilerParams(
            dimension_semantics=("parallel",)),
    )(xt_flat, slab)

    out = out_flat.reshape(b_pad, n, 1)[:b]
    return out[0] if single else out


def init_params():
    """Deterministic parameter init matching nn.Linear shapes (stored as (in, out))."""
    key = jax.random.PRNGKey(42)
    keys = jax.random.split(key, 8)
    dims = [(6, 32), (32, 16), (16, 4), (4, 1)]
    params = {}
    for i, (fan_in, fan_out) in enumerate(dims, start=1):
        bound = 1.0 / (fan_in ** 0.5)
        params[f"w{i}"] = jax.random.uniform(
            keys[2 * (i - 1)], (fan_in, fan_out), jnp.float32, -bound, bound)
        params[f"b{i}"] = jax.random.uniform(
            keys[2 * (i - 1) + 1], (1, fan_out), jnp.float32, -bound, bound)
    return params


def agent_reference(x, tags, params):
    h = jnp.maximum(x @ params["w1"] + params["b1"], 0.0)
    h = jnp.maximum(h @ params["w2"] + params["b2"], 0.0)
    h = jnp.maximum(h @ params["w3"] + params["b3"], 0.0)
    y = h @ params["w4"] + params["b4"]
    y = y - tags
    return jax.nn.softmax(y, axis=0)


if __name__ == "__main__":
    N = 8  # number of candidate rows (softmax is taken over this axis)
    key = jax.random.PRNGKey(0)
    kx, kt, kbx, kbt, kcx, kct = jax.random.split(key, 6)

    params = init_params()

    # --- single problem (exact original module semantics) -------------------
    x = jax.random.normal(kx, (N, 6), dtype=jnp.float32)
    tags = jax.random.normal(kt, (N, 1), dtype=jnp.float32)
    out = jax.block_until_ready(agent_forward(x, tags, params))
    ref = agent_reference(x, tags, params)
    assert out.shape == (N, 1)
    assert jnp.allclose(out, ref, atol=1e-5, rtol=1e-5), "single-problem mismatch"

    # --- batched: B=4 independent problems in one chunk ----------------------
    B = 4
    xb = jax.random.normal(kbx, (B, N, 6), dtype=jnp.float32)
    tb = jax.random.normal(kbt, (B, N, 1), dtype=jnp.float32)
    outb = jax.block_until_ready(agent_forward(xb, tb, params))
    refb = jax.vmap(lambda xi, ti: agent_reference(xi, ti, params))(xb, tb)
    assert outb.shape == (B, N, 1)
    assert jnp.allclose(outb, refb, atol=1e-5, rtol=1e-5), "batched mismatch"

    # --- batched: B=10 -> exercises multi-chunk grid + batch padding path ----
    B2 = 10
    xc = jax.random.normal(kcx, (B2, N, 6), dtype=jnp.float32)
    tc = jax.random.normal(kct, (B2, N, 1), dtype=jnp.float32)
    outc = jax.block_until_ready(agent_forward(xc, tc, params))
    refc = jax.vmap(lambda xi, ti: agent_reference(xi, ti, params))(xc, tc)
    assert outc.shape == (B2, N, 1)
    assert jnp.allclose(outc, refc, atol=1e-5, rtol=1e-5), "multi-chunk mismatch"

    print("KERNEL_OK")
</pallas_src>

<mosaic_0001>
module attributes {stable_mosaic.version = 11 : i64} {
  func.func @agent_kernel(%arg0: i32, %arg1: memref<8x8xf32, #tpu.memory_space<vmem>>, %arg2: memref<64x128xf32, #tpu.memory_space<vmem>>, %arg3: memref<8x1xf32, #tpu.memory_space<vmem>>) attributes {dimension_semantics = [#tpu.dimension_semantics<parallel>], iteration_bounds = array<i64: 1>, scalar_prefetch = 0 : i64, scratch_operands = 0 : i64, tpu.core_type = #tpu.core_type<tc>, window_params = [{transform_indices = @transform_0, window_bounds = array<i64: 8, 8>}, {pipeline_mode = #tpu.pipeline_mode<synchronous>, transform_indices = @transform_1, window_bounds = array<i64: 64, 128>}, {transform_indices = @transform_2, window_bounds = array<i64: 8, 1>}]} {
    %c0 = arith.constant 0 : index
    %c0_0 = arith.constant 0 : index
    %0 = vector.load %arg1[%c0, %c0_0] : memref<8x8xf32, #tpu.memory_space<vmem>>, vector<8x8xf32>
    %c0_1 = arith.constant 0 : index
    %c0_2 = arith.constant 0 : index
    %1 = vector.load %arg2[%c0_1, %c0_2] : memref<64x128xf32, #tpu.memory_space<vmem>>, vector<8x32xf32>
    %c8 = arith.constant 8 : index
    %c0_3 = arith.constant 0 : index
    %2 = vector.load %arg2[%c8, %c0_3] : memref<64x128xf32, #tpu.memory_space<vmem>>, vector<32x16xf32>
    %c40 = arith.constant 40 : index
    %c0_4 = arith.constant 0 : index
    %3 = vector.load %arg2[%c40, %c0_4] : memref<64x128xf32, #tpu.memory_space<vmem>>, vector<4x16xf32>
    %c48 = arith.constant 48 : index
    %c0_5 = arith.constant 0 : index
    %4 = vector.load %arg2[%c48, %c0_5] : memref<64x128xf32, #tpu.memory_space<vmem>>, vector<1x32xf32>
    %c49 = arith.constant 49 : index
    %c0_6 = arith.constant 0 : index
    %5 = vector.load %arg2[%c49, %c0_6] : memref<64x128xf32, #tpu.memory_space<vmem>>, vector<1x16xf32>
    %c50 = arith.constant 50 : index
    %c0_7 = arith.constant 0 : index
    %6 = vector.load %arg2[%c50, %c0_7] : memref<64x128xf32, #tpu.memory_space<vmem>>, vector<1x4xf32>
    %c51 = arith.constant 51 : index
    %c0_8 = arith.constant 0 : index
    %7 = vector.load %arg2[%c51, %c0_8] : memref<64x128xf32, #tpu.memory_space<vmem>>, vector<1x4xf32>
    %c52 = arith.constant 52 : index
    %c0_9 = arith.constant 0 : index
    %8 = vector.load %arg2[%c52, %c0_9] : memref<64x128xf32, #tpu.memory_space<vmem>>, vector<1x1xf32>
    %cst = arith.constant dense<0.000000e+00> : vector<8x32xf32>
    %9 = tpu.matmul %0, %1, %cst {dimension_numbers = #tpu.dot_dimension_numbers<[1], [0], [0], [1], [0, 0, 1, 1], [], []>} : vector<8x8xf32>, vector<8x32xf32>, vector<8x32xf32> -> vector<8x32xf32>
    %10 = vector.broadcast %4 : vector<1x32xf32> to vector<8x32xf32>
    %11 = arith.addf %9, %10 : vector<8x32xf32>
    %cst_10 = arith.constant 0.000000e+00 : f32
    %12 = vector.broadcast %cst_10 : f32 to vector<8x32xf32>
    %13 = arith.maximumf %11, %12 : vector<8x32xf32>
    %cst_11 = arith.constant dense<0.000000e+00> : vector<8x16xf32>
    %14 = tpu.matmul %13, %2, %cst_11 {dimension_numbers = #tpu.dot_dimension_numbers<[1], [0], [0], [1], [0, 0, 1, 1], [], []>} : vector<8x32xf32>, vector<32x16xf32>, vector<8x16xf32> -> vector<8x16xf32>
    %15 = vector.broadcast %5 : vector<1x16xf32> to vector<8x16xf32>
    %16 = arith.addf %14, %15 : vector<8x16xf32>
    %cst_12 = arith.constant 0.000000e+00 : f32
    %17 = vector.broadcast %cst_12 : f32 to vector<8x16xf32>
    %18 = arith.maximumf %16, %17 : vector<8x16xf32>
    %cst_13 = arith.constant 0.000000e+00 : f32
    %19 = vector.broadcast %cst_13 : f32 to vector<8x1xf32>
    %20 = vector.broadcast %8 : vector<1x1xf32> to vector<8x1xf32>
    %21 = arith.addf %19, %20 : vector<8x1xf32>
    %22 = vector.extract_strided_slice %3 {offsets = [0, 0], sizes = [1, 16], strides = [1, 1]} : vector<4x16xf32> to vector<1x16xf32>
    %23 = vector.broadcast %22 : vector<1x16xf32> to vector<8x16xf32>
    %24 = arith.mulf %18, %23 : vector<8x16xf32>
    %cst_14 = arith.constant dense<0.000000e+00> : vector<8xf32>
    %25 = vector.multi_reduction <add>, %24, %cst_14 [1] : vector<8x16xf32> to vector<8xf32>
    %26 = vector.shape_cast %25 : vector<8xf32> to vector<8x1xf32>
    %27 = vector.extract_strided_slice %6 {offsets = [0, 0], sizes = [1, 1], strides = [1, 1]} : vector<1x4xf32> to vector<1x1xf32>
    %28 = vector.broadcast %27 : vector<1x1xf32> to vector<8x1xf32>
    %29 = arith.addf %26, %28 : vector<8x1xf32>
    %cst_15 = arith.constant 0.000000e+00 : f32
    %30 = vector.broadcast %cst_15 : f32 to vector<8x1xf32>
    %31 = arith.maximumf %29, %30 : vector<8x1xf32>
    %32 = vector.extract_strided_slice %7 {offsets = [0, 0], sizes = [1, 1], strides = [1, 1]} : vector<1x4xf32> to vector<1x1xf32>
    %33 = vector.broadcast %32 : vector<1x1xf32> to vector<8x1xf32>
    %34 = arith.mulf %31, %33 : vector<8x1xf32>
    %35 = arith.addf %21, %34 : vector<8x1xf32>
    %36 = vector.extract_strided_slice %3 {offsets = [1, 0], sizes = [1, 16], strides = [1, 1]} : vector<4x16xf32> to vector<1x16xf32>
    %37 = vector.broadcast %36 : vector<1x16xf32> to vector<8x16xf32>
    %38 = arith.mulf %18, %37 : vector<8x16xf32>
    %cst_16 = arith.constant dense<0.000000e+00> : vector<8xf32>
    %39 = vector.multi_reduction <add>, %38, %cst_16 [1] : vector<8x16xf32> to vector<8xf32>
    %40 = vector.shape_cast %39 : vector<8xf32> to vector<8x1xf32>
    %41 = vector.extract_strided_slice %6 {offsets = [0, 1], sizes = [1, 1], strides = [1, 1]} : vector<1x4xf32> to vector<1x1xf32>
    %42 = vector.broadcast %41 : vector<1x1xf32> to vector<8x1xf32>
    %43 = arith.addf %40, %42 : vector<8x1xf32>
    %cst_17 = arith.constant 0.000000e+00 : f32
    %44 = vector.broadcast %cst_17 : f32 to vector<8x1xf32>
    %45 = arith.maximumf %43, %44 : vector<8x1xf32>
    %46 = vector.extract_strided_slice %7 {offsets = [0, 1], sizes = [1, 1], strides = [1, 1]} : vector<1x4xf32> to vector<1x1xf32>
    %47 = vector.broadcast %46 : vector<1x1xf32> to vector<8x1xf32>
    %48 = arith.mulf %45, %47 : vector<8x1xf32>
    %49 = arith.addf %35, %48 : vector<8x1xf32>
    %50 = vector.extract_strided_slice %3 {offsets = [2, 0], sizes = [1, 16], strides = [1, 1]} : vector<4x16xf32> to vector<1x16xf32>
    %51 = vector.broadcast %50 : vector<1x16xf32> to vector<8x16xf32>
    %52 = arith.mulf %18, %51 : vector<8x16xf32>
    %cst_18 = arith.constant dense<0.000000e+00> : vector<8xf32>
    %53 = vector.multi_reduction <add>, %52, %cst_18 [1] : vector<8x16xf32> to vector<8xf32>
    %54 = vector.shape_cast %53 : vector<8xf32> to vector<8x1xf32>
    %55 = vector.extract_strided_slice %6 {offsets = [0, 2], sizes = [1, 1], strides = [1, 1]} : vector<1x4xf32> to vector<1x1xf32>
    %56 = vector.broadcast %55 : vector<1x1xf32> to vector<8x1xf32>
    %57 = arith.addf %54, %56 : vector<8x1xf32>
    %cst_19 = arith.constant 0.000000e+00 : f32
    %58 = vector.broadcast %cst_19 : f32 to vector<8x1xf32>
    %59 = arith.maximumf %57, %58 : vector<8x1xf32>
    %60 = vector.extract_strided_slice %7 {offsets = [0, 2], sizes = [1, 1], strides = [1, 1]} : vector<1x4xf32> to vector<1x1xf32>
    %61 = vector.broadcast %60 : vector<1x1xf32> to vector<8x1xf32>
    %62 = arith.mulf %59, %61 : vector<8x1xf32>
    %63 = arith.addf %49, %62 : vector<8x1xf32>
    %64 = vector.extract_strided_slice %3 {offsets = [3, 0], sizes = [1, 16], strides = [1, 1]} : vector<4x16xf32> to vector<1x16xf32>
    %65 = vector.broadcast %64 : vector<1x16xf32> to vector<8x16xf32>
    %66 = arith.mulf %18, %65 : vector<8x16xf32>
    %cst_20 = arith.constant dense<0.000000e+00> : vector<8xf32>
    %67 = vector.multi_reduction <add>, %66, %cst_20 [1] : vector<8x16xf32> to vector<8xf32>
    %68 = vector.shape_cast %67 : vector<8xf32> to vector<8x1xf32>
    %69 = vector.extract_strided_slice %6 {offsets = [0, 3], sizes = [1, 1], strides = [1, 1]} : vector<1x4xf32> to vector<1x1xf32>
    %70 = vector.broadcast %69 : vector<1x1xf32> to vector<8x1xf32>
    %71 = arith.addf %68, %70 : vector<8x1xf32>
    %cst_21 = arith.constant 0.000000e+00 : f32
    %72 = vector.broadcast %cst_21 : f32 to vector<8x1xf32>
    %73 = arith.maximumf %71, %72 : vector<8x1xf32>
    %74 = vector.extract_strided_slice %7 {offsets = [0, 3], sizes = [1, 1], strides = [1, 1]} : vector<1x4xf32> to vector<1x1xf32>
    %75 = vector.broadcast %74 : vector<1x1xf32> to vector<8x1xf32>
    %76 = arith.mulf %73, %75 : vector<8x1xf32>
    %77 = arith.addf %63, %76 : vector<8x1xf32>
    %78 = vector.extract_strided_slice %0 {offsets = [0, 6], sizes = [8, 1], strides = [1, 1]} : vector<8x8xf32> to vector<8x1xf32>
    %79 = arith.subf %77, %78 : vector<8x1xf32>
    %cst_22 = arith.constant dense<0xFF800000> : vector<1xf32>
    %80 = vector.multi_reduction <maximumf>, %79, %cst_22 [0] : vector<8x1xf32> to vector<1xf32>
    %81 = vector.shape_cast %80 : vector<1xf32> to vector<1x1xf32>
    %82 = vector.broadcast %81 : vector<1x1xf32> to vector<8x1xf32>
    %83 = arith.subf %79, %82 : vector<8x1xf32>
    %84 = math.exp %83 : vector<8x1xf32>
    %cst_23 = arith.constant dense<0.000000e+00> : vector<1xf32>
    %85 = vector.multi_reduction <add>, %84, %cst_23 [0] : vector<8x1xf32> to vector<1xf32>
    %86 = vector.shape_cast %85 : vector<1xf32> to vector<1x1xf32>
    %87 = tpu.reciprocal %86 : vector<1x1xf32> -> vector<1x1xf32>
    %88 = vector.broadcast %87 : vector<1x1xf32> to vector<8x1xf32>
    %89 = arith.mulf %84, %88 : vector<8x1xf32>
    %c0_24 = arith.constant 0 : index
    %c0_25 = arith.constant 0 : index
    %90 = vector.load %arg3[%c0_24, %c0_25] : memref<8x1xf32, #tpu.memory_space<vmem>>, vector<8x1xf32>
    tpu.vector_store %arg3[%c0_24, %c0_25], %89 {strides = array<i32>} : memref<8x1xf32, #tpu.memory_space<vmem>>, vector<8x1xf32>,
    return
  }
  func.func @transform_0(%arg0: i32) -> (i32, i32) {
    %c0_i32 = arith.constant 0 : i32
    %c0_i32_0 = arith.constant 0 : i32
    return %arg0, %c0_i32 : i32, i32
  }
  func.func @transform_1(%arg0: i32) -> (i32, i32) {
    %c0_i32 = arith.constant 0 : i32
    %c0_i32_0 = arith.constant 0 : i32
    %c0_i32_1 = arith.constant 0 : i32
    return %c0_i32, %c0_i32_0 : i32, i32
  }
  func.func @transform_2(%arg0: i32) -> (i32, i32) {
    %c0_i32 = arith.constant 0 : i32
    %c0_i32_0 = arith.constant 0 : i32
    return %arg0, %c0_i32 : i32, i32
  }
}

</mosaic_0001>

<llo_original>
// kernel: tpu_custom_call.1
$region0: #{tpu_custom_call.1}
  #allocation0 [shape = 'u32[]', space=smem, size = 0x4, offset = 0x4, fixed_abs, tag = 'smem constant byte address 0x4 - core index']
  #allocation1 [shape = 'u32[144,128]{1,0:T(1,128)}', space=vmem, size = 0x12000, scoped, tag = 'internal scratch']
  %s0 = inlined_call_operand.hbm [shape: f32[8,8], index: 0, kind: input, shape index: {}]
  %s1 = inlined_call_operand.hbm [shape: f32[64,128], index: 1, kind: input, shape index: {}]
  %s2 = inlined_call_operand.vmem [shape: f32[8,1], index: 2, kind: output, shape index: {}]
  %s3 = sld [smem:[#allocation0]]
  $region26: #{tpu_custom_call.1} parent=0
    _
  %s5 = ssub.s32 1, %s3
  %s6 = scalar_select 0, %s5, %s3
  $region1: #{tpu_custom_call.1} parent=0
    #allocation2 [shape = 'u8[4096]{0}', space=vmem, size = 0x1000, scoped, tag = 'input window, operand 0, single buffered']
    #allocation3 [shape = 's32[1]{0}', space=sflag, size = 0x4, scoped, tag = 'scoped memory for tpu_custom_call.1']
    #allocation4 [shape = 'u8[32768]{0}', space=vmem, size = 0x8000, scoped, tag = 'input window, operand 1, single buffered']
    #allocation5 [shape = 's32[1]{0}', space=sflag, size = 0x4, scoped, tag = 'scoped memory for tpu_custom_call.1']
    %7 = vsyncpa [#allocation3], 0
    %8 = vsyncpa [#allocation5], 0
    // Predicated region
    $region2: #{tpu_custom_call.1} parent=1 // pred_check
      _
    $region3: #{tpu_custom_call.1} parent=1 // pred_check_branch
      %10 = sbr.rel (0) target = $region5
    $region4: #{tpu_custom_call.1} parent=1 // pred_region
      %s12 = ssub.s32 128, 128
      %13 = vsyncadd [#allocation3], %s12
      %s15 = sshll.u32 [#allocation2], 4
      %s16 = int_to_ptr.vmem [resolvable:$true] %s15
      %18 = dma.hbm_to_vmem [thread:$0]  %s0, 128, %s16, [#allocation3]
    $region5: #{tpu_custom_call.1} parent=1 // pred_fallthru
      _
    // Predicated region
    $region6: #{tpu_custom_call.1} parent=1 // pred_check
      _
    $region7: #{tpu_custom_call.1} parent=1 // pred_check_branch
      %20 = sbr.rel (0) target = $region9
    $region8: #{tpu_custom_call.1} parent=1 // pred_region
      %s22 = ssub.s32 1024, 1024
      %23 = vsyncadd [#allocation5], %s22
      %s24 = sshll.u32 [#allocation4], 4
      %s25 = int_to_ptr.vmem [resolvable:$true] %s24
      %30 = dma.hbm_to_vmem [thread:$0]  %s1, 1024, %s25, [#allocation5], 128, 128, 8
    $region9: #{tpu_custom_call.1} parent=1 // pred_fallthru
      _
    // Predicated region
    $region10: #{tpu_custom_call.1} parent=1 // pred_check
      _
    $region11: #{tpu_custom_call.1} parent=1 // pred_check_branch
      %32 = sbr.rel (0) target = $region13
    $region12: #{tpu_custom_call.1} parent=1 // pred_region
      %33 = dma.done [#allocation3], 128
    $region13: #{tpu_custom_call.1} parent=1 // pred_fallthru
      _
    // Predicated region
    $region14: #{tpu_custom_call.1} parent=1 // pred_check
      _
    $region15: #{tpu_custom_call.1} parent=1 // pred_check_branch
      %35 = sbr.rel (0) target = $region17
    $region16: #{tpu_custom_call.1} parent=1 // pred_region
      %36 = dma.done [#allocation5], 1024
    $region17: #{tpu_custom_call.1} parent=1 // pred_fallthru
      _
    %v37 = vld [vmem:[#allocation2] sm:$0xff]
    %v38 = vld [vmem:[#allocation4] sm:$0xff]
    %v39 = vld [vmem:[#allocation4 + $0x8] sm:$0xff]
    %v40 = vld [vmem:[#allocation4 + $0x10] sm:$0xff]
    %v41 = vld [vmem:[#allocation4 + $0x18] sm:$0xff]
    %v42 = vld [vmem:[#allocation4 + $0x20] sm:$0xff]
    %v43 = vld [vmem:[#allocation4 + $0x28] sm:$0xf]
    %v44 = vld [vmem:[#allocation4 + $0x30] sm:$0x1]
    %v45 = vld [vmem:[#allocation4 + $0x31] sm:$0x1]
    %v46 = vld [vmem:[#allocation4 + $0x32] sm:$0x1]
    %v47 = vld [vmem:[#allocation4 + $0x33] sm:$0x1]
    %v48 = vld [vmem:[#allocation4 + $0x34] sm:$0x1]
    %v49 = vlaneseq
    %v50 = vshrl.u32 %v49, 7
    %v51 = vsub.s32 0, %v50
    %v52 = vrot.slane %v44, %v51
    %vm53 = vcmask 64512
    %v55 = vsel %vm53, %v37, 0
    %57 = vmatprep.subr.mxu0 0.0
    %58 = vmatpush1.msra.mxu0 0.0
    %59 = vmatprep.subr.mxu0 0.0
    %60 = vmatpush1.msra.mxu0 0.0
    %61 = vmatprep.subr.mxu0 0.0
    %62 = vmatpush1.msra.mxu0 0.0
    %63 = vmatprep.subr.mxu0 0.0
    %64 = vmatpush1.msra.mxu0 0.0
    %65 = vmatprep.subr.mxu0 0.0
    %66 = vmatpush1.msra.mxu0 0.0
    %67 = vmatprep.subr.mxu0 0.0
    %68 = vmatpush1.msra.mxu0 0.0
    %69 = vmatprep.subr.mxu0 0.0
    %70 = vmatpush1.msra.mxu0 0.0
    %71 = vmatprep.subr.mxu0 0.0
    %72 = vmatpush1.msra.mxu0 0.0
    %73 = vmatprep.subr.mxu0 0.0
    %74 = vmatpush1.msra.mxu0 0.0
    %75 = vmatprep.subr.mxu0 0.0
    %76 = vmatpush1.msra.mxu0 0.0
    %77 = vmatprep.subr.mxu0 0.0
    %78 = vmatpush1.msra.mxu0 0.0
    %79 = vmatprep.subr.mxu0 0.0
    %80 = vmatpush1.msra.mxu0 0.0
    %81 = vmatprep.subr.mxu0 0.0
    %82 = vmatpush1.msra.mxu0 0.0
    %83 = vmatprep.subr.mxu0 0.0
    %84 = vmatpush1.msra.mxu0 0.0
    %85 = vmatprep.subr.mxu0 0.0
    %86 = vmatpush1.msra.mxu0 0.0
    %87 = vmatprep.subr.mxu0 0.0
    %88 = vmatpush1.msra.mxu0 %v38
    %89 = vmatprep.subr.mxu0 0.0
    %90 = vmatpush2.msra.mxu0 0.0
    %91 = vmatprep.subr.mxu0 0.0
    %92 = vmatpush2.msra.mxu0 0.0
    %93 = vmatprep.subr.mxu0 0.0
    %94 = vmatpush2.msra.mxu0 0.0
    %95 = vmatprep.subr.mxu0 0.0
    %96 = vmatpush2.msra.mxu0 0.0
    %97 = vmatprep.subr.mxu0 0.0
    %98 = vmatpush2.msra.mxu0 0.0
    %99 = vmatprep.subr.mxu0 0.0
    %100 = vmatpush2.msra.mxu0 0.0
    %101 = vmatprep.subr.mxu0 0.0
    %102 = vmatpush2.msra.mxu0 0.0
    %103 = vmatprep.subr.mxu0 0.0
    %104 = vmatpush2.msra.mxu0 0.0
    %105 = vmatprep.subr.mxu0 0.0
    %106 = vmatpush2.msra.mxu0 0.0
    %107 = vmatprep.subr.mxu0 0.0
    %108 = vmatpush2.msra.mxu0 0.0
    %109 = vmatprep.subr.mxu0 0.0
    %110 = vmatpush2.msra.mxu0 0.0
    %111 = vmatprep.subr.mxu0 0.0
    %112 = vmatpush2.msra.mxu0 0.0
    %113 = vmatprep.subr.mxu0 0.0
    %114 = vmatpush2.msra.mxu0 0.0
    %115 = vmatprep.subr.mxu0 0.0
    %116 = vmatpush2.msra.mxu0 0.0
    %117 = vmatprep.subr.mxu0 0.0
    %118 = vmatpush2.msra.mxu0 0.0
    %119 = vmatprep.subr.mxu0 0.0
    %120 = vmatpush2.msra.mxu0 0.0
    %121 = vmatprep.mubr.f32.mxu0 0.0
    %122 = vmatmul.mubr.f32.gmra.mxu0 %v55
    %v123 = vpop.f32.mrf.mxu0
    %v124 = vadd.f32 %v52, %v123
    %v125 = vpop.f32.mrf.mxu0
    %126 = vdwg.mxu0
    %v127 = vmax.f32 %v124, 0.0
    %v128 = vlaneseq
    %v129 = vshrl.u32 %v128, 7
    %v130 = vsub.s32 0, %v129
    %v131 = vrot.slane %v45, %v130
    %vm132 = vcmask 261120
    %v134 = vsel %vm132, %v127, 0
    %136 = vmatprep.subr.mxu0 0.0
    %137 = vmatpush1.msra.mxu0 0.0
    %138 = vmatprep.subr.mxu0 0.0
    %139 = vmatpush1.msra.mxu0 0.0
    %140 = vmatprep.subr.mxu0 0.0
    %141 = vmatpush1.msra.mxu0 0.0
    %142 = vmatprep.subr.mxu0 0.0
    %143 = vmatpush1.msra.mxu0 0.0
    %144 = vmatprep.subr.mxu0 0.0
    %145 = vmatpush1.msra.mxu0 0.0
    %146 = vmatprep.subr.mxu0 0.0
    %147 = vmatpush1.msra.mxu0 0.0
    %148 = vmatprep.subr.mxu0 0.0
    %149 = vmatpush1.msra.mxu0 0.0
    %150 = vmatprep.subr.mxu0 0.0
    %151 = vmatpush1.msra.mxu0 0.0
    %152 = vmatprep.subr.mxu0 0.0
    %153 = vmatpush1.msra.mxu0 0.0
    %154 = vmatprep.subr.mxu0 0.0
    %155 = vmatpush1.msra.mxu0 0.0
    %156 = vmatprep.subr.mxu0 0.0
    %157 = vmatpush1.msra.mxu0 0.0
    %158 = vmatprep.subr.mxu0 0.0
    %159 = vmatpush1.msra.mxu0 0.0
    %160 = vmatprep.subr.mxu0 0.0
    %161 = vmatpush1.msra.mxu0 %v42
    %162 = vmatprep.subr.mxu0 0.0
    %163 = vmatpush1.msra.mxu0 %v41
    %164 = vmatprep.subr.mxu0 0.0
    %165 = vmatpush1.msra.mxu0 %v40
    %166 = vmatprep.subr.mxu0 0.0
    %167 = vmatpush1.msra.mxu0 %v39
    %168 = vmatprep.subr.mxu0 0.0
    %169 = vmatpush2.msra.mxu0 0.0
    %170 = vmatprep.subr.mxu0 0.0
    %171 = vmatpush2.msra.mxu0 0.0
    %172 = vmatprep.subr.mxu0 0.0
    %173 = vmatpush2.msra.mxu0 0.0
    %174 = vmatprep.subr.mxu0 0.0
    %175 = vmatpush2.msra.mxu0 0.0
    %176 = vmatprep.subr.mxu0 0.0
    %177 = vmatpush2.msra.mxu0 0.0
    %178 = vmatprep.subr.mxu0 0.0
    %179 = vmatpush2.msra.mxu0 0.0
    %180 = vmatprep.subr.mxu0 0.0
    %181 = vmatpush2.msra.mxu0 0.0
    %182 = vmatprep.subr.mxu0 0.0
    %183 = vmatpush2.msra.mxu0 0.0
    %184 = vmatprep.subr.mxu0 0.0
    %185 = vmatpush2.msra.mxu0 0.0
    %186 = vmatprep.subr.mxu0 0.0
    %187 = vmatpush2.msra.mxu0 0.0
    %188 = vmatprep.subr.mxu0 0.0
    %189 = vmatpush2.msra.mxu0 0.0
    %190 = vmatprep.subr.mxu0 0.0
    %191 = vmatpush2.msra.mxu0 0.0
    %192 = vmatprep.subr.mxu0 0.0
    %193 = vmatpush2.msra.mxu0 0.0
    %194 = vmatprep.subr.mxu0 0.0
    %195 = vmatpush2.msra.mxu0 0.0
    %196 = vmatprep.subr.mxu0 0.0
    %197 = vmatpush2.msra.mxu0 0.0
    %198 = vmatprep.subr.mxu0 0.0
    %199 = vmatpush2.msra.mxu0 0.0
    %200 = vmatprep.mubr.f32.mxu0 0.0
    %201 = vmatmul.mubr.f32.gmra.mxu0 %v134
    %v202 = vpop.f32.mrf.mxu0
    %v203 = vadd.f32 %v131, %v202
    %v204 = vpop.f32.mrf.mxu0
    %205 = vdwg.mxu0
    %v206 = vmax.f32 %v203, 0.0
    %v207 = vlaneseq
    %v208 = vshrl.u32 %v207, 7
    %v209 = vsub.s32 0, %v208
    %v210 = vrot.slane %v48, %v209
    %v211 = vadd.f32 %v210, 0.0
    %v212 = vlaneseq
    %v213 = vshrl.u32 %v212, 7
    %v214 = vsub.s32 0, %v213
    %v215 = vrot.slane %v43, %v214
    %v216 = vmul.f32 %v206, %v215
    %vm217 = vcmask 130048
    %v218 = vsel %vm217, %v216, 0.0
    %219 = vadd.xlane.f32.xlu0 %v218
    %v220 = vpop.xlane.xlu0 %219
    %v221 = vlaneseq
    %v222 = vshrl.u32 %v221, 7
    %v223 = vsub.s32 0, %v222
    %v224 = vrot.slane %v46, %v223
    %v225 = vadd.f32 %v220, %v224
    %v226 = vmax.f32 %v225, 0.0
    %v227 = vlaneseq
    %v228 = vshrl.u32 %v227, 7
    %v229 = vsub.s32 0, %v228
    %v230 = vrot.slane %v47, %v229
    %v231 = vmul.f32 %v226, %v230
    %v232 = vadd.f32 %v211, %v231
    %v233 = vlaneseq
    %v234 = vshrl.u32 %v233, 7
    %v235 = vsub.s32 1, %v234
    %v236 = vrot.slane %v43, %v235
    %v237 = vmul.f32 %v206, %v236
    %v238 = vsel %vm217, %v237, 0.0
    %239 = vadd.xlane.f32.xlu0 %v238
    %v240 = vpop.xlane.xlu0 %239
    %v241 = vadd.f32 %v240, %v224
    %v242 = vmax.f32 %v241, 0.0
    %v243 = vmul.f32 %v242, %v230
    %245 = vrot.lane.b32.xlu0 %v243, 127
    %v246 = vpop.permute.xlu0 %245
    %v248 = vadd.f32 %v232, %v246
    %v249 = vlaneseq
    %v250 = vshrl.u32 %v249, 7
    %v251 = vsub.s32 2, %v250
    %v252 = vrot.slane %v43, %v251
    %v253 = vmul.f32 %v206, %v252
    %v254 = vsel %vm217, %v253, 0.0
    %255 = vadd.xlane.f32.xlu0 %v254
    %v256 = vpop.xlane.xlu0 %255
    %v257 = vadd.f32 %v256, %v224
    %v258 = vmax.f32 %v257, 0.0
    %v259 = vmul.f32 %v258, %v230
    %261 = vrot.lane.b32.xlu0 %v259, 126
    %v262 = vpop.permute.xlu0 %261
    %v264 = vadd.f32 %v248, %v262
    %v265 = vlaneseq
    %v266 = vshrl.u32 %v265, 7
    %v267 = vsub.s32 3, %v266
    %v268 = vrot.slane %v43, %v267
    %v269 = vmul.f32 %v206, %v268
    %v270 = vsel %vm217, %v269, 0.0
    %271 = vadd.xlane.f32.xlu0 %v270
    %v272 = vpop.xlane.xlu0 %271
    %v273 = vadd.f32 %v272, %v224
    %v274 = vmax.f32 %v273, 0.0
    %v275 = vmul.f32 %v274, %v230
    %277 = vrot.lane.b32.xlu0 %v275, 125
    %v278 = vpop.permute.xlu0 %277
    %v280 = vadd.f32 %v264, %v278
    %281 = vrot.lane.b32.xlu0 %v37, 122
    %v282 = vpop.permute.xlu0 %281
    %v284 = vsub.f32 %v280, %v282
    %vm285 = vcmask 7168
    %v286 = vsel %vm285, %v284, -inf
    %v287 = vrot.slane %v286, 4
    %v288 = vmax.f32 %v286, %v287
    %v289 = vrot.slane %v288, 2
    %v290 = vmax.f32 %v288, %v289
    %v291 = vrot.slane %v290, 1
    %v292 = vmax.f32 %v290, %v291
    %v293 = vsub.f32 %v284, %v292
    %v294 = vmul.f32 %v293, 1.442695
    %v295 = vpow.pop %v294
    %v296 = vsel %vm285, %v295, 0.0
    %v297 = vrot.slane %v296, 4
    %v298 = vadd.f32 %v296, %v297
    %v299 = vrot.slane %v298, 2
    %v300 = vadd.f32 %v298, %v299
    %v301 = vrot.slane %v300, 1
    %v302 = vadd.f32 %v300, %v301
    %v303 = vrcp.pop %v302
    %v304 = vmul.f32 %v295, %v303
    %305 = vst.msk [vmem:[%s2] sm:$0xff] %vm285, %v304
    // Predicated region
    $region18: #{tpu_custom_call.1} parent=1 // pred_check
      _
    $region19: #{tpu_custom_call.1} parent=1 // pred_check_branch
      %307 = sbr.rel (0) target = $region21
    $region20: #{tpu_custom_call.1} parent=1 // pred_region
      _
    $region21: #{tpu_custom_call.1} parent=1 // pred_fallthru
      _
    // Predicated region
    $region22: #{tpu_custom_call.1} parent=1 // pred_check
      _
    $region23: #{tpu_custom_call.1} parent=1 // pred_check_branch
      %309 = sbr.rel (0) target = $region25
    $region24: #{tpu_custom_call.1} parent=1 // pred_region
      _
    $region25: #{tpu_custom_call.1} parent=1 // pred_fallthru
      _
    %310 = vsyncpa [#allocation3], 1
    %311 = vsyncpa [#allocation5], 1

</llo_original>
